<compile_context>
chip_gen: v7x
topology: tpu7x:2x2x1
jax: 0.10.0
libtpu: 0.0.40
codegen_flags: <defaults>
</compile_context>

<pallas_src>
import functools

import jax
import jax.numpy as jnp
from jax import lax
from jax.experimental import pallas as pl
from jax.experimental.pallas import tpu as pltpu

_EPS = 1e-5
_VMEM_LIMIT = 48 << 20            # scoped VMEM request (< 64 MiB v7x physical)
_FUSED_F32_BYTES_MAX = 4 << 20    # fuse the passes when x (as f32) is <= 4 MiB


def _sigmoid(z):
    # Single-EUP sigmoid (tanh) instead of exp + divide.
    return 0.5 * jnp.tanh(0.5 * z) + 0.5


def _fused_kernel(x_ref, gw_ref, bw_ref, o_ref, *, inv_count):
    """Whole tensor resident in VMEM: stats + BN/gate fold + apply in one pass.

    x_ref : (N, C, L) input         (native dtype)
    gw_ref: (1, C, 1) gamma * w_bn  (f32)
    bw_ref: (1, C, 1) beta  * w_bn  (f32)
    o_ref : (N, C, L) output        (native dtype)
    """
    xs = x_ref[...].astype(jnp.float32)                       # (N, C, L)
    s_nc = jnp.sum(xs, axis=2, keepdims=True)                 # (N, C, 1)
    q_nc = jnp.sum(xs * xs, axis=2, keepdims=True)            # (N, C, 1)
    mean = jnp.sum(s_nc, axis=0, keepdims=True) * inv_count   # (1, C, 1)
    ex2 = jnp.sum(q_nc, axis=0, keepdims=True) * inv_count
    var = ex2 - mean * mean                                    # biased (train BN)
    a = gw_ref[...] * lax.rsqrt(var + _EPS)
    b = bw_ref[...] - mean * a
    gate = _sigmoid(xs * a + b)
    o_ref[...] = (gate * xs).astype(o_ref.dtype)


def _stats_kernel(x_ref, sum_ref, sq_ref):
    """Per-batch partial per-channel sum / sum-of-squares.

    Grid = (N, L/TL): batch axis "parallel" (v7x megacore shards it), lane-tile
    axis "arbitrary".  The (C, 1) output blocks stay resident across j and
    double as accumulators (init at j == 0).
    """
    j = pl.program_id(1)

    @pl.when(j == 0)
    def _init():
        sum_ref[...] = jnp.zeros_like(sum_ref)
        sq_ref[...] = jnp.zeros_like(sq_ref)

    xs = x_ref[...].astype(jnp.float32)                        # (C, TL)
    sum_ref[...] += jnp.sum(xs, axis=-1, keepdims=True)        # (C, 1)
    sq_ref[...] += jnp.sum(xs * xs, axis=-1, keepdims=True)    # (C, 1)


def _apply_kernel(x_ref, a_ref, b_ref, o_ref):
    """out = sigmoid(x * a + b) * x; per-channel constants broadcast over lanes."""
    xs = x_ref[...].astype(jnp.float32)                        # (C, TL)
    gate = _sigmoid(xs * a_ref[...] + b_ref[...])              # one EUP op / elem
    o_ref[...] = (gate * xs).astype(o_ref.dtype)


def _max_tile_elems():
    """Per-generation lane-tile element budget (f32-equivalent bytes / 4)."""
    try:
        kind = jax.devices()[0].device_kind.lower()
    except Exception:  # pragma: no cover - defensive
        kind = ""
    if "v5 lite" in kind or "v5e" in kind:
        return 768 * 1024       # ~3 MiB
    if "v7" in kind or "7x" in kind:
        return 1536 * 1024      # ~6 MiB (3.2 TB/s -> amortize per-step overhead)
    return 1024 * 1024          # ~4 MiB (v6e and default)


def _pick_lane_tile(l, c, max_tile_elems):
    """Largest multiple of 128 that divides l (a multiple of 128) within budget."""
    cap = max(128, (max_tile_elems // max(c, 1)) // 128 * 128)
    tl = min(l, cap)
    while l % tl != 0:
        tl -= 128
    return tl


@functools.partial(jax.jit, static_argnames=("fuse",))
def nam_forward(x_nchw, gamma, beta, *, fuse=None):
    """NAM forward. x_nchw: (N, C, H, W); gamma, beta: (C,). Returns (N, C, H, W)."""
    n, c, h, w = x_nchw.shape
    l = h * w
    x3 = x_nchw.reshape(n, c, l)          # pure reshape -- no transpose, no copy
    dtype = x3.dtype
    itemsize = int(jnp.dtype(dtype).itemsize)
    inv_count = 1.0 / float(n * l)        # original (un-padded) element count

    g = gamma.astype(jnp.float32).reshape(c, 1)
    bt = beta.astype(jnp.float32).reshape(c, 1)
    abs_g = jnp.abs(g)
    wbn = abs_g / jnp.sum(abs_g)          # tiny global sum, stays in XLA
    gw = g * wbn                          # a = gw * rsqrt(var + eps)
    bw = bt * wbn                         # b = bw - mean * a

    if fuse is None:
        fuse = (n * c * l * 4) <= _FUSED_F32_BYTES_MAX

    if fuse:
        # ---- Fused path: whole x resident in VMEM, 1 read + 1 write of HBM ----
        vmem_spec = pl.BlockSpec(memory_space=pltpu.MemorySpace.VMEM)
        out3 = pl.pallas_call(
            functools.partial(_fused_kernel, inv_count=inv_count),
            out_shape=jax.ShapeDtypeStruct((n, c, l), dtype),
            in_specs=[vmem_spec, vmem_spec, vmem_spec],
            out_specs=vmem_spec,
            compiler_params=pltpu.CompilerParams(vmem_limit_bytes=_VMEM_LIMIT),
            cost_estimate=pl.CostEstimate(
                flops=int(8 * n * c * l),
                transcendentals=int(n * c * l),
                bytes_accessed=int(2 * n * c * l * itemsize)),
        )(x3, gw.reshape(1, c, 1), bw.reshape(1, c, 1))
        return out3.reshape(n, c, h, w)

    # ---- Tiled two-pass path ----------------------------------------------
    budget = _max_tile_elems()
    l_pad = l
    if l % 128 == 0:
        tl = _pick_lane_tile(l, c, budget)
    elif c * l <= 2 * budget:
        # Un-padded full rows: correct (masked stores only), no extra HBM copies.
        tl = l
    else:
        # Zero-pad L up to a multiple of 128.  Zeros add nothing to sum/sumsq
        # and inv_count uses the original count, so mean/var stay exact.
        l_pad = ((l + 127) // 128) * 128
        x3 = jnp.pad(x3, ((0, 0), (0, 0), (0, l_pad - l)))
        tl = _pick_lane_tile(l_pad, c, budget)

    grid = (n, l_pad // tl)
    x_spec = pl.BlockSpec((None, c, tl), lambda i, j: (i, 0, j))
    col_spec = pl.BlockSpec((None, c, 1), lambda i, j: (i, 0, 0))
    vec_spec = pl.BlockSpec((c, 1), lambda i, j: (0, 0))

    # Pass 1: per-batch partial per-channel sums (batch axis "parallel" so the
    # v7x megacore shards it); tiny cross-batch fold + BN fold done in XLA.
    sum_n, sq_n = pl.pallas_call(
        _stats_kernel,
        out_shape=(jax.ShapeDtypeStruct((n, c, 1), jnp.float32),
                   jax.ShapeDtypeStruct((n, c, 1), jnp.float32)),
        grid=grid,
        in_specs=[x_spec],
        out_specs=(col_spec, col_spec),
        compiler_params=pltpu.CompilerParams(
            dimension_semantics=("parallel", "arbitrary"),
            vmem_limit_bytes=_VMEM_LIMIT),
        cost_estimate=pl.CostEstimate(
            flops=int(3 * n * c * l_pad),
            transcendentals=0,
            bytes_accessed=int(n * c * l_pad * itemsize + 8 * n * c)),
    )(x3)

    mean = jnp.sum(sum_n, axis=0) * inv_count            # (c, 1)
    var = jnp.sum(sq_n, axis=0) * inv_count - mean * mean
    a_c = gw * lax.rsqrt(var + _EPS)                     # (c, 1)
    b_c = bw - mean * a_c                                # (c, 1)

    # Pass 2: elementwise gate, fully parallel (megacore-shardable).
    out3 = pl.pallas_call(
        _apply_kernel,
        out_shape=jax.ShapeDtypeStruct((n, c, l_pad), dtype),
        grid=grid,
        in_specs=[x_spec, vec_spec, vec_spec],
        out_specs=x_spec,
        compiler_params=pltpu.CompilerParams(
            dimension_semantics=("parallel", "parallel"),
            vmem_limit_bytes=_VMEM_LIMIT),
        cost_estimate=pl.CostEstimate(
            flops=int(5 * n * c * l_pad),
            transcendentals=int(n * c * l_pad),
            bytes_accessed=int(2 * n * c * l_pad * itemsize + 8 * c)),
    )(x3, a_c, b_c)

    if l_pad != l:
        out3 = out3[:, :, :l]
    return out3.reshape(n, c, h, w)


def _reference(x_nchw, gamma, beta):
    """Pure-JAX reference mirroring the PyTorch forward (train-mode BN)."""
    xf = x_nchw.astype(jnp.float32)
    mean = jnp.mean(xf, axis=(0, 2, 3), keepdims=True)
    var = jnp.mean((xf - mean) ** 2, axis=(0, 2, 3), keepdims=True)
    y = (xf - mean) * lax.rsqrt(var + _EPS)
    y = y * gamma[None, :, None, None] + beta[None, :, None, None]
    w_bn = jnp.abs(gamma) / jnp.sum(jnp.abs(gamma))
    return (jax.nn.sigmoid(y * w_bn[None, :, None, None]) * xf).astype(x_nchw.dtype)


if __name__ == "__main__":
    key = jax.random.PRNGKey(0)
    k_x, k_g, k_b = jax.random.split(key, 3)

    N, C, H, W = 2, 4, 16, 16
    x = jax.random.normal(k_x, (N, C, H, W), dtype=jnp.float32)
    # Deterministic, non-trivial BN affine params so attention is non-uniform.
    gamma = 1.0 + 0.5 * jax.random.normal(k_g, (C,), dtype=jnp.float32)
    beta = 0.1 * jax.random.normal(k_b, (C,), dtype=jnp.float32)

    ref = _reference(x, gamma, beta)

    # Fused (x fits in VMEM) path -- the default choice for this shape.
    out_fused = jax.block_until_ready(nam_forward(x, gamma, beta))
    assert out_fused.shape == (N, C, H, W)
    assert out_fused.dtype == x.dtype
    assert jnp.allclose(out_fused, ref, atol=2e-5, rtol=1e-5), (
        "fused path mismatch vs reference, max abs err = "
        f"{float(jnp.max(jnp.abs(out_fused - ref)))}")

    # Tiled two-pass path (what large tensors take) -- forced for coverage.
    out_tiled = jax.block_until_ready(nam_forward(x, gamma, beta, fuse=False))
    assert out_tiled.shape == (N, C, H, W)
    assert out_tiled.dtype == x.dtype
    assert jnp.allclose(out_tiled, ref, atol=2e-5, rtol=1e-5), (
        "tiled path mismatch vs reference, max abs err = "
        f"{float(jnp.max(jnp.abs(out_tiled - ref)))}")

    print("KERNEL_OK")
</pallas_src>

<mosaic_0001>
module attributes {stable_mosaic.version = 11 : i64} {
  func.func @_fused_kernel(%arg0: memref<2x4x256xf32, #tpu.memory_space<vmem>>, %arg1: memref<1x4x1xf32, #tpu.memory_space<vmem>>, %arg2: memref<1x4x1xf32, #tpu.memory_space<vmem>>, %arg3: memref<2x4x256xf32, #tpu.memory_space<vmem>>) attributes {dimension_semantics = [], scalar_prefetch = 0 : i64, scratch_operands = 0 : i64, tpu.core_type = #tpu.core_type<tc>} {
    %c0 = arith.constant 0 : index
    %c0_0 = arith.constant 0 : index
    %c0_1 = arith.constant 0 : index
    %0 = vector.load %arg0[%c0, %c0_0, %c0_1] : memref<2x4x256xf32, #tpu.memory_space<vmem>>, vector<2x4x256xf32>
    %cst = arith.constant dense<0.000000e+00> : vector<2x4xf32>
    %1 = vector.multi_reduction <add>, %0, %cst [2] : vector<2x4x256xf32> to vector<2x4xf32>
    %2 = vector.shape_cast %1 : vector<2x4xf32> to vector<2x4x1xf32>
    %3 = arith.mulf %0, %0 : vector<2x4x256xf32>
    %cst_2 = arith.constant dense<0.000000e+00> : vector<2x4xf32>
    %4 = vector.multi_reduction <add>, %3, %cst_2 [2] : vector<2x4x256xf32> to vector<2x4xf32>
    %5 = vector.shape_cast %4 : vector<2x4xf32> to vector<2x4x1xf32>
    %cst_3 = arith.constant dense<0.000000e+00> : vector<4x1xf32>
    %6 = vector.multi_reduction <add>, %2, %cst_3 [0] : vector<2x4x1xf32> to vector<4x1xf32>
    %7 = vector.shape_cast %6 : vector<4x1xf32> to vector<1x4x1xf32>
    %cst_4 = arith.constant 0.001953125 : f32
    %8 = vector.broadcast %cst_4 : f32 to vector<1x4x1xf32>
    %9 = arith.mulf %7, %8 : vector<1x4x1xf32>
    %cst_5 = arith.constant dense<0.000000e+00> : vector<4x1xf32>
    %10 = vector.multi_reduction <add>, %5, %cst_5 [0] : vector<2x4x1xf32> to vector<4x1xf32>
    %11 = vector.shape_cast %10 : vector<4x1xf32> to vector<1x4x1xf32>
    %cst_6 = arith.constant 0.001953125 : f32
    %12 = vector.broadcast %cst_6 : f32 to vector<1x4x1xf32>
    %13 = arith.mulf %11, %12 : vector<1x4x1xf32>
    %14 = arith.mulf %9, %9 : vector<1x4x1xf32>
    %15 = arith.subf %13, %14 : vector<1x4x1xf32>
    %c0_7 = arith.constant 0 : index
    %c0_8 = arith.constant 0 : index
    %c0_9 = arith.constant 0 : index
    %16 = vector.load %arg1[%c0_7, %c0_8, %c0_9] : memref<1x4x1xf32, #tpu.memory_space<vmem>>, vector<1x4x1xf32>
    %cst_10 = arith.constant 9.99999974E-6 : f32
    %17 = vector.broadcast %cst_10 : f32 to vector<1x4x1xf32>
    %18 = arith.addf %15, %17 : vector<1x4x1xf32>
    %19 = math.rsqrt %18 : vector<1x4x1xf32>
    %20 = arith.mulf %16, %19 : vector<1x4x1xf32>
    %c0_11 = arith.constant 0 : index
    %c0_12 = arith.constant 0 : index
    %c0_13 = arith.constant 0 : index
    %21 = vector.load %arg2[%c0_11, %c0_12, %c0_13] : memref<1x4x1xf32, #tpu.memory_space<vmem>>, vector<1x4x1xf32>
    %22 = arith.mulf %9, %20 : vector<1x4x1xf32>
    %23 = arith.subf %21, %22 : vector<1x4x1xf32>
    %24 = vector.broadcast %20 : vector<1x4x1xf32> to vector<2x4x256xf32>
    %25 = arith.mulf %0, %24 : vector<2x4x256xf32>
    %26 = vector.broadcast %23 : vector<1x4x1xf32> to vector<2x4x256xf32>
    %27 = arith.addf %25, %26 : vector<2x4x256xf32>
    %cst_14 = arith.constant 5.000000e-01 : f32
    %28 = vector.broadcast %cst_14 : f32 to vector<2x4x256xf32>
    %29 = arith.mulf %28, %27 : vector<2x4x256xf32>
    %30 = math.tanh %29 : vector<2x4x256xf32>
    %cst_15 = arith.constant 5.000000e-01 : f32
    %31 = vector.broadcast %cst_15 : f32 to vector<2x4x256xf32>
    %32 = arith.mulf %31, %30 : vector<2x4x256xf32>
    %cst_16 = arith.constant 5.000000e-01 : f32
    %33 = vector.broadcast %cst_16 : f32 to vector<2x4x256xf32>
    %34 = arith.addf %32, %33 : vector<2x4x256xf32>
    %35 = arith.mulf %34, %0 : vector<2x4x256xf32>
    %c0_17 = arith.constant 0 : index
    %c0_18 = arith.constant 0 : index
    %c0_19 = arith.constant 0 : index
    %36 = vector.load %arg3[%c0_17, %c0_18, %c0_19] : memref<2x4x256xf32, #tpu.memory_space<vmem>>, vector<2x4x256xf32>
    tpu.vector_store %arg3[%c0_17, %c0_18, %c0_19], %35 {strides = array<i32>} : memref<2x4x256xf32, #tpu.memory_space<vmem>>, vector<2x4x256xf32>,
    return
  }
}

</mosaic_0001>

<llo_original>
// kernel: nam_forward.1
$region0: #{nam_forward.1}
  #allocation0 [shape = 'u32[]', space=smem, size = 0x4, offset = 0x4, fixed_abs, tag = 'smem constant byte address 0x4 - core index']
  #allocation1 [shape = 'u32[144,128]{1,0:T(1,128)}', space=vmem, size = 0x12000, scoped, tag = 'internal scratch']
  %s0 = inlined_call_operand.vmem [shape: f32[2,4,256], index: 0, kind: input, shape index: {}]
  %s1 = inlined_call_operand.vmem [shape: f32[1,4,1], index: 1, kind: input, shape index: {}]
  %s2 = inlined_call_operand.vmem [shape: f32[1,4,1], index: 2, kind: input, shape index: {}]
  %s3 = inlined_call_operand.vmem [shape: f32[2,4,256], index: 3, kind: output, shape index: {}]
  %s4 = sld [smem:[#allocation0]]
  $region22: #{nam_forward.1} parent=0
    _
  %s6 = ssub.s32 1, %s4
  %s7 = scalar_select 0, %s6, %s4
  // Predicated region
  $region2: #{nam_forward.1} parent=0 // pred_check
    _
  $region3: #{nam_forward.1} parent=0 // pred_check_branch
    %9 = sbr.rel (0) target = $region5
  $region4: #{nam_forward.1} parent=0 // pred_region
    _
  $region5: #{nam_forward.1} parent=0 // pred_fallthru
    _
  // Predicated region
  $region6: #{nam_forward.1} parent=0 // pred_check
    _
  $region7: #{nam_forward.1} parent=0 // pred_check_branch
    %11 = sbr.rel (0) target = $region9
  $region8: #{nam_forward.1} parent=0 // pred_region
    _
  $region9: #{nam_forward.1} parent=0 // pred_fallthru
    _
  // Predicated region
  $region10: #{nam_forward.1} parent=0 // pred_check
    _
  $region11: #{nam_forward.1} parent=0 // pred_check_branch
    %13 = sbr.rel (0) target = $region13
  $region12: #{nam_forward.1} parent=0 // pred_region
    _
  $region13: #{nam_forward.1} parent=0 // pred_fallthru
    _
  %v14 = vld [vmem:[%s0] sm:$0xff]
  %v15 = vld [vmem:[%s0 + $0x8] sm:$0xff]
  %v18 = vcombine.high %v14, %v14
  %v19 = vcombine.high %v15, %v15
  %vm22 = vcmask 1043456
  %v23 = vsel %vm22, %v14, 0.0
  %v24 = vsel %vm22, %v18, 0.0
  %v25 = vadd.f32 %v23, %v24
  %26 = vadd.xlane.f32.xlu0 %v25
  %v27 = vpop.xlane.xlu0 %26
  %v28 = vsel %vm22, %v15, 0.0
  %v29 = vsel %vm22, %v19, 0.0
  %v30 = vadd.f32 %v28, %v29
  %31 = vadd.xlane.f32.xlu0 %v30
  %v32 = vpop.xlane.xlu0 %31
  %v33 = vmul.f32 %v14, %v14
  %v34 = vmul.f32 %v15, %v15
  %v37 = vcombine.high %v33, %v33
  %v38 = vcombine.high %v34, %v34
  %v41 = vsel %vm22, %v33, 0.0
  %v42 = vsel %vm22, %v37, 0.0
  %v43 = vadd.f32 %v41, %v42
  %44 = vadd.xlane.f32.xlu0 %v43
  %v45 = vpop.xlane.xlu0 %44
  %v46 = vsel %vm22, %v34, 0.0
  %v47 = vsel %vm22, %v38, 0.0
  %v48 = vadd.f32 %v46, %v47
  %49 = vadd.xlane.f32.xlu0 %v48
  %v50 = vpop.xlane.xlu0 %49
  %v51 = vsel %vm22, %v27, 0.0
  %v52 = vsel %vm22, %v32, 0.0
  %v53 = vadd.f32 %v51, %v52
  %v54 = vmul.f32 %v53, 0.001953125
  %v55 = vsel %vm22, %v45, 0.0
  %v56 = vsel %vm22, %v50, 0.0
  %v57 = vadd.f32 %v55, %v56
  %v58 = vmul.f32 %v57, 0.001953125
  %v59 = vmul.f32 %v54, %v54
  %v60 = vsub.f32 %v58, %v59
  %v61 = vld [vmem:[%s1] sm:$0xf]
  %v62 = vadd.f32 %v60, 1e-05
  %v63 = vrsqrt.pop %v62
  %v64 = vmul.f32 %v61, %v63
  %v65 = vld [vmem:[%s2] sm:$0xf]
  %v66 = vmul.f32 %v54, %v64
  %v67 = vsub.f32 %v65, %v66
  %69 = vset.pattern.permute.xlu0 0
  %70 = vperm.xlu0 %69, %v64
  %v71 = vpop.permute.xlu0 %70
  %v73 = vunpack.c.l.s4 839922192
  %v74 = vunpack.c.0.s8 %v73
  %v75 = vlaneseq
  %v76 = vshrl.u32 %v75, 7
  %v77 = vsub.s32 %v74, %v76
  %v78 = vrot.slane %v71, %v77
  %v80 = vmul.f32 %v14, %v78
  %v81 = vmul.f32 %v15, %v78
  %83 = vset.pattern.permute.xlu0 0
  %84 = vperm.xlu0 %83, %v67
  %v85 = vpop.permute.xlu0 %84
  %v87 = vunpack.c.l.s4 839922192
  %v88 = vunpack.c.0.s8 %v87
  %v89 = vlaneseq
  %v90 = vshrl.u32 %v89, 7
  %v91 = vsub.s32 %v88, %v90
  %v92 = vrot.slane %v85, %v91
  %v94 = vadd.f32 %v80, %v92
  %v95 = vadd.f32 %v81, %v92
  %v96 = vmul.f32 %v94, 0.5
  %v97 = vmul.f32 %v95, 0.5
  %v98 = vtanh.pop %v96
  %v99 = vtanh.pop %v97
  %v100 = vmul.f32 %v98, 0.5
  %v101 = vmul.f32 %v99, 0.5
  %v102 = vadd.f32 %v100, 0.5
  %v103 = vadd.f32 %v101, 0.5
  %v104 = vmul.f32 %v102, %v14
  %v105 = vmul.f32 %v103, %v15
  %106 = vst [vmem:[%s3] sm:$0xff] %v104
  %107 = vst [vmem:[%s3 + $0x8] sm:$0xff] %v105
  // Predicated region
  $region14: #{nam_forward.1} parent=0 // pred_check
    _
  $region15: #{nam_forward.1} parent=0 // pred_check_branch
    %109 = sbr.rel (0) target = $region17
  $region16: #{nam_forward.1} parent=0 // pred_region
    _
  $region17: #{nam_forward.1} parent=0 // pred_fallthru
    _
  // Predicated region
  $region18: #{nam_forward.1} parent=0 // pred_check
    _
  $region19: #{nam_forward.1} parent=0 // pred_check_branch
    %111 = sbr.rel (0) target = $region21
  $region20: #{nam_forward.1} parent=0 // pred_region
    _
  $region21: #{nam_forward.1} parent=0 // pred_fallthru
    _

</llo_original>
